<compile_context>
chip_gen: v6e
topology: v6e:2x2x1
jax: 0.10.0
libtpu: 0.0.40
codegen_flags: <defaults>
</compile_context>

<pallas_src>
import jax
import jax.numpy as jnp
from jax import lax
from jax.experimental import pallas as pl
from jax.experimental.pallas import tpu as pltpu


def _round_up(x, m):
    return (x + m - 1) // m * m


def mlp_regression_kernel(x_ref, w1_ref, b1_ref, w3_ref, b3_ref, o_ref):
    # fc1 on the MXU: (TB, In) @ (In, H) -> (TB, H), f32 accumulation.
    h = jnp.dot(x_ref[...], w1_ref[...], preferred_element_type=jnp.float32)
    # bias add (VPU) + sigmoid (EUP), all f32.
    h = jax.nn.sigmoid(h + b1_ref[...])
    # fc3 in NT orientation: (1, H) . (TB, H)^T -> (1, TB), lane-dense row.
    out = lax.dot_general(
        w3_ref[...], h,
        dimension_numbers=(((1,), (1,)), ((), ())),
        preferred_element_type=jnp.float32,
    )
    # b3 is a scalar in SMEM; broadcast-add and store the full (1, TB) row.
    o_ref[...] = (out + b3_ref[0, 0]).astype(o_ref.dtype)


def mlp_regression_forward(x, w1, b1, w3, b3, *, block_b=4096):
    """x: (B, In) f32; w1: (In, H); b1: (1, H); w3: (H, 1); b3: (1, 1)."""
    B, In = x.shape
    In_w, H = w1.shape
    assert In == In_w

    # Batch tile: multiple of 128 so the (1, TB) output block is lane-dense,
    # large enough to amortize the ~0.35us per-grid-step overhead, tiny vs VMEM
    # (TB=4096 -> x block = 4096*In*4 B; double-buffered it is still << 32 MiB).
    tb = max(128, min(block_b, _round_up(B, 128)))
    b_pad = _round_up(B, tb)
    if b_pad != B:
        x = jnp.pad(x, ((0, b_pad - B), (0, 0)))
    num_tiles = b_pad // tb

    w3_row = w3.reshape(1, H)   # store fc3 weight as a row for the NT matmul
    b1_row = b1.reshape(1, H)
    b3_s = b3.reshape(1, 1)     # scalar, lives in SMEM

    grid_spec = pltpu.PrefetchScalarGridSpec(
        num_scalar_prefetch=0,
        grid=(num_tiles,),
        in_specs=[
            pl.BlockSpec((tb, In), lambda i: (i, 0)),            # x: batch-tiled
            pl.BlockSpec((In, H), lambda i: (0, 0)),             # w1: resident
            pl.BlockSpec((1, H), lambda i: (0, 0)),              # b1: resident
            pl.BlockSpec((1, H), lambda i: (0, 0)),              # w3 row: resident
            pl.BlockSpec(memory_space=pltpu.MemorySpace.SMEM),   # b3 scalar
        ],
        out_specs=pl.BlockSpec((1, tb), lambda i: (0, i)),       # lane-dense row
    )

    out_row = pl.pallas_call(
        mlp_regression_kernel,
        out_shape=jax.ShapeDtypeStruct((1, b_pad), jnp.float32),
        grid_spec=grid_spec,
        compiler_params=pltpu.CompilerParams(
            dimension_semantics=("parallel",),     # shard batch tiles over TCs
            vmem_limit_bytes=32 * 1024 * 1024,     # explicit, fits v7x's 64 MiB
        ),
    )(x, w1, b1_row, w3_row, b3_s)

    # (1, B_pad) row -> (B, 1) column, dropping the batch padding.
    return out_row[0, :B, None]


def init_params(key, input_size, hidden_size, bias_fill=0.0):
    """Deterministic PyTorch-Linear-style init (uniform +/- 1/sqrt(fan_in))."""
    k1, k2, k3, k4 = jax.random.split(key, 4)
    lim1 = 1.0 / jnp.sqrt(jnp.float32(input_size))
    lim3 = 1.0 / jnp.sqrt(jnp.float32(hidden_size))
    # stored pre-transposed relative to nn.Linear's (out, in) weight
    w1 = jax.random.uniform(k1, (input_size, hidden_size), jnp.float32, -lim1, lim1)
    b1 = jnp.full((1, hidden_size), bias_fill, jnp.float32)  # fc1.bias.data.fill_(bias)
    w3 = jax.random.uniform(k3, (hidden_size, 1), jnp.float32, -lim3, lim3)
    b3 = jax.random.uniform(k4, (1, 1), jnp.float32, -lim3, lim3)
    return w1, b1, w3, b3


if __name__ == "__main__":
    input_size = 16
    hidden_size = 32
    batch = 8

    key = jax.random.PRNGKey(0)
    kx, kp = jax.random.split(key)
    x = jax.random.normal(kx, (batch, input_size), jnp.float32)
    w1, b1, w3, b3 = init_params(kp, input_size, hidden_size, bias_fill=0.0)

    out = mlp_regression_forward(x, w1, b1, w3, b3)
    out = jax.block_until_ready(out)

    # pure-JAX reference check of the same semantics
    ref = jax.nn.sigmoid(x @ w1 + b1) @ w3 + b3
    assert out.shape == (batch, 1)
    assert jnp.allclose(out, ref, atol=1e-5, rtol=1e-5), float(jnp.max(jnp.abs(out - ref)))

    print("KERNEL_OK")
</pallas_src>

<mosaic_0001>
module attributes {stable_mosaic.version = 11 : i64} {
  func.func @mlp_regression_kernel(%arg0: i32, %arg1: memref<128x16xf32, #tpu.memory_space<vmem>>, %arg2: memref<16x32xf32, #tpu.memory_space<vmem>>, %arg3: memref<1x32xf32, #tpu.memory_space<vmem>>, %arg4: memref<1x32xf32, #tpu.memory_space<vmem>>, %arg5: memref<1x1xf32, #tpu.memory_space<smem>>, %arg6: memref<1x128xf32, #tpu.memory_space<vmem>>) attributes {dimension_semantics = [#tpu.dimension_semantics<parallel>], iteration_bounds = array<i64: 1>, scalar_prefetch = 0 : i64, scratch_operands = 0 : i64, tpu.core_type = #tpu.core_type<tc>, window_params = [{transform_indices = @transform_0, window_bounds = array<i64: 128, 16>}, {pipeline_mode = #tpu.pipeline_mode<synchronous>, transform_indices = @transform_1, window_bounds = array<i64: 16, 32>}, {pipeline_mode = #tpu.pipeline_mode<synchronous>, transform_indices = @transform_2, window_bounds = array<i64: 1, 32>}, {pipeline_mode = #tpu.pipeline_mode<synchronous>, transform_indices = @transform_3, window_bounds = array<i64: 1, 32>}, {transform_indices = @transform_4, window_bounds = array<i64: 1, 1>}, {transform_indices = @transform_5, window_bounds = array<i64: 1, 128>}]} {
    %c0 = arith.constant 0 : index
    %c0_0 = arith.constant 0 : index
    %0 = vector.load %arg1[%c0, %c0_0] : memref<128x16xf32, #tpu.memory_space<vmem>>, vector<128x16xf32>
    %c0_1 = arith.constant 0 : index
    %c0_2 = arith.constant 0 : index
    %1 = vector.load %arg2[%c0_1, %c0_2] : memref<16x32xf32, #tpu.memory_space<vmem>>, vector<16x32xf32>
    %cst = arith.constant dense<0.000000e+00> : vector<128x32xf32>
    %2 = tpu.matmul %0, %1, %cst {dimension_numbers = #tpu.dot_dimension_numbers<[1], [0], [0], [1], [0, 0, 1, 1], [], []>} : vector<128x16xf32>, vector<16x32xf32>, vector<128x32xf32> -> vector<128x32xf32>
    %c0_3 = arith.constant 0 : index
    %c0_4 = arith.constant 0 : index
    %3 = vector.load %arg3[%c0_3, %c0_4] : memref<1x32xf32, #tpu.memory_space<vmem>>, vector<1x32xf32>
    %4 = vector.broadcast %3 : vector<1x32xf32> to vector<128x32xf32>
    %5 = arith.addf %2, %4 : vector<128x32xf32>
    %6 = arith.negf %5 : vector<128x32xf32>
    %7 = math.exp %6 : vector<128x32xf32>
    %cst_5 = arith.constant 1.000000e+00 : f32
    %8 = vector.broadcast %cst_5 : f32 to vector<128x32xf32>
    %9 = arith.addf %8, %7 : vector<128x32xf32>
    %10 = arith.divf %8, %9 : vector<128x32xf32>
    %c0_6 = arith.constant 0 : index
    %c0_7 = arith.constant 0 : index
    %11 = vector.load %arg4[%c0_6, %c0_7] : memref<1x32xf32, #tpu.memory_space<vmem>>, vector<1x32xf32>
    %cst_8 = arith.constant dense<0.000000e+00> : vector<1x128xf32>
    %12 = tpu.matmul %11, %10, %cst_8 {dimension_numbers = #tpu.dot_dimension_numbers<[1], [1], [0], [0], [0, 0, 1, 0], [], []>} : vector<1x32xf32>, vector<128x32xf32>, vector<1x128xf32> -> vector<1x128xf32>
    %c0_9 = arith.constant 0 : index
    %c0_10 = arith.constant 0 : index
    %13 = memref.load %arg5[%c0_9, %c0_10] : memref<1x1xf32, #tpu.memory_space<smem>>
    %14 = vector.broadcast %13 : f32 to vector<1x128xf32>
    %15 = arith.addf %12, %14 : vector<1x128xf32>
    %c0_11 = arith.constant 0 : index
    %c0_12 = arith.constant 0 : index
    %16 = vector.load %arg6[%c0_11, %c0_12] : memref<1x128xf32, #tpu.memory_space<vmem>>, vector<1x128xf32>
    tpu.vector_store %arg6[%c0_11, %c0_12], %15 {strides = array<i32>} : memref<1x128xf32, #tpu.memory_space<vmem>>, vector<1x128xf32>,
    return
  }
  func.func @transform_0(%arg0: i32) -> (i32, i32) {
    %c0_i32 = arith.constant 0 : i32
    %c0_i32_0 = arith.constant 0 : i32
    return %arg0, %c0_i32 : i32, i32
  }
  func.func @transform_1(%arg0: i32) -> (i32, i32) {
    %c0_i32 = arith.constant 0 : i32
    %c0_i32_0 = arith.constant 0 : i32
    %c0_i32_1 = arith.constant 0 : i32
    return %c0_i32, %c0_i32_0 : i32, i32
  }
  func.func @transform_2(%arg0: i32) -> (i32, i32) {
    %c0_i32 = arith.constant 0 : i32
    %c0_i32_0 = arith.constant 0 : i32
    %c0_i32_1 = arith.constant 0 : i32
    return %c0_i32, %c0_i32_0 : i32, i32
  }
  func.func @transform_3(%arg0: i32) -> (i32, i32) {
    %c0_i32 = arith.constant 0 : i32
    %c0_i32_0 = arith.constant 0 : i32
    %c0_i32_1 = arith.constant 0 : i32
    return %c0_i32, %c0_i32_0 : i32, i32
  }
  func.func @transform_4(%arg0: i32) -> (i32, i32) {
    %c0_i32 = arith.constant 0 : i32
    %c0_i32_0 = arith.constant 0 : i32
    %c0_i32_1 = arith.constant 0 : i32
    return %c0_i32, %c0_i32_0 : i32, i32
  }
  func.func @transform_5(%arg0: i32) -> (i32, i32) {
    %c0_i32 = arith.constant 0 : i32
    %c0_i32_0 = arith.constant 0 : i32
    return %c0_i32, %arg0 : i32, i32
  }
}

</mosaic_0001>

<llo_original>
// kernel: tpu_custom_call.1
$region0: #{tpu_custom_call.1}
  #allocation0 [shape = 'u32[]', space=smem, size = 0x4, offset = 0x4, fixed_abs, tag = 'smem constant byte address 0x4 - core index']
  #allocation1 [shape = 'u32[144,128]{1,0:T(1,128)}', space=vmem, size = 0x12000, scoped, tag = 'internal scratch']
  #allocation2 [shape = 'f32[1,1]{1,0:T(1,128)S(6)}', space=smem, size = 0x200, scoped, tag = 'scoped memory for tpu_custom_call.1']
  %s0 = inlined_call_operand.vmem [shape: f32[128,16], index: 0, kind: input, shape index: {}]
  %s1 = inlined_call_operand.vmem [shape: f32[16,32], index: 1, kind: input, shape index: {}]
  %s2 = inlined_call_operand.vmem [shape: f32[1,32], index: 2, kind: input, shape index: {}]
  %s3 = inlined_call_operand.vmem [shape: f32[1,32], index: 3, kind: input, shape index: {}]
  %s4 = inlined_call_operand.<no memory space> [shape: f32[1,1], index: 4, kind: input, shape index: {}]
  %s5 = inlined_call_operand.hbm [shape: f32[1,128], index: 5, kind: output, shape index: {}]
  %s6 = sld [smem:[#allocation0]]
  $region30: #{tpu_custom_call.1} parent=0
    _
  %s8 = ssub.s32 1, %s6
  %s9 = scalar_select 0, %s8, %s6
  %10 = sst [smem:[#allocation2]] %s4
  $region1: #{tpu_custom_call.1} parent=0
    #allocation3 [shape = 'u8[512]{0}', space=vmem, size = 0x400, scoped, tag = 'output window, operand 0, single buffered']
    #allocation4 [shape = 's32[1]{0}', space=sflag, size = 0x4, scoped, tag = 'scoped memory for tpu_custom_call.1']
    %11 = vsyncpa [#allocation4], 0
    // Predicated region
    $region2: #{tpu_custom_call.1} parent=1 // pred_check
      _
    $region3: #{tpu_custom_call.1} parent=1 // pred_check_branch
      %13 = sbr.rel (0) target = $region5
    $region4: #{tpu_custom_call.1} parent=1 // pred_region
      _
    $region5: #{tpu_custom_call.1} parent=1 // pred_fallthru
      _
    // Predicated region
    $region6: #{tpu_custom_call.1} parent=1 // pred_check
      _
    $region7: #{tpu_custom_call.1} parent=1 // pred_check_branch
      %15 = sbr.rel (0) target = $region9
    $region8: #{tpu_custom_call.1} parent=1 // pred_region
      _
    $region9: #{tpu_custom_call.1} parent=1 // pred_fallthru
      _
    // Predicated region
    $region10: #{tpu_custom_call.1} parent=1 // pred_check
      _
    $region11: #{tpu_custom_call.1} parent=1 // pred_check_branch
      %17 = sbr.rel (0) target = $region13
    $region12: #{tpu_custom_call.1} parent=1 // pred_region
      _
    $region13: #{tpu_custom_call.1} parent=1 // pred_fallthru
      _
    // Predicated region
    $region14: #{tpu_custom_call.1} parent=1 // pred_check
      _
    $region15: #{tpu_custom_call.1} parent=1 // pred_check_branch
      %19 = sbr.rel (0) target = $region17
    $region16: #{tpu_custom_call.1} parent=1 // pred_region
      _
    $region17: #{tpu_custom_call.1} parent=1 // pred_fallthru
      _
    // Predicated region
    $region18: #{tpu_custom_call.1} parent=1 // pred_check
      _
    $region19: #{tpu_custom_call.1} parent=1 // pred_check_branch
      %21 = sbr.rel (0) target = $region21
    $region20: #{tpu_custom_call.1} parent=1 // pred_region
      _
    $region21: #{tpu_custom_call.1} parent=1 // pred_fallthru
      _
    %v22 = vld [vmem:[%s0] sm:$0xff]
    %v23 = vld [vmem:[%s0 + $0x8] sm:$0xff]
    %v24 = vld [vmem:[%s0 + $0x10] sm:$0xff]
    %v25 = vld [vmem:[%s0 + $0x18] sm:$0xff]
    %v26 = vld [vmem:[%s0 + $0x20] sm:$0xff]
    %v27 = vld [vmem:[%s0 + $0x28] sm:$0xff]
    %v28 = vld [vmem:[%s0 + $0x30] sm:$0xff]
    %v29 = vld [vmem:[%s0 + $0x38] sm:$0xff]
    %v30 = vld [vmem:[%s0 + $0x40] sm:$0xff]
    %v31 = vld [vmem:[%s0 + $0x48] sm:$0xff]
    %v32 = vld [vmem:[%s0 + $0x50] sm:$0xff]
    %v33 = vld [vmem:[%s0 + $0x58] sm:$0xff]
    %v34 = vld [vmem:[%s0 + $0x60] sm:$0xff]
    %v35 = vld [vmem:[%s0 + $0x68] sm:$0xff]
    %v36 = vld [vmem:[%s0 + $0x70] sm:$0xff]
    %v37 = vld [vmem:[%s0 + $0x78] sm:$0xff]
    %v38 = vld [vmem:[%s1] sm:$0xff]
    %v39 = vld [vmem:[%s1 + $0x8] sm:$0xff]
    %v40 = vld [vmem:[%s2] sm:$0x1]
    %v42 = vlaneseq
    %v43 = vshrl.u32 %v42, 7
    %v44 = vsub.s32 0, %v43
    %v45 = vrot.slane %v40, %v44
    %vm47 = vcmask 130048
    %v49 = vsel %vm47, %v22, 0
    %v52 = vsel %vm47, %v23, 0
    %v55 = vsel %vm47, %v24, 0
    %v58 = vsel %vm47, %v25, 0
    %v61 = vsel %vm47, %v26, 0
    %v64 = vsel %vm47, %v27, 0
    %v67 = vsel %vm47, %v28, 0
    %v70 = vsel %vm47, %v29, 0
    %v73 = vsel %vm47, %v30, 0
    %v76 = vsel %vm47, %v31, 0
    %v79 = vsel %vm47, %v32, 0
    %v82 = vsel %vm47, %v33, 0
    %v85 = vsel %vm47, %v34, 0
    %v88 = vsel %vm47, %v35, 0
    %v91 = vsel %vm47, %v36, 0
    %v94 = vsel %vm47, %v37, 0
    %96 = vmatprep.subr.mxu0 0.0
    %97 = vmatpush1.msra.mxu0 0.0
    %98 = vmatprep.subr.mxu0 0.0
    %99 = vmatpush1.msra.mxu0 0.0
    %100 = vmatprep.subr.mxu0 0.0
    %101 = vmatpush1.msra.mxu0 0.0
    %102 = vmatprep.subr.mxu0 0.0
    %103 = vmatpush1.msra.mxu0 0.0
    %104 = vmatprep.subr.mxu0 0.0
    %105 = vmatpush1.msra.mxu0 0.0
    %106 = vmatprep.subr.mxu0 0.0
    %107 = vmatpush1.msra.mxu0 0.0
    %108 = vmatprep.subr.mxu0 0.0
    %109 = vmatpush1.msra.mxu0 0.0
    %110 = vmatprep.subr.mxu0 0.0
    %111 = vmatpush1.msra.mxu0 0.0
    %112 = vmatprep.subr.mxu0 0.0
    %113 = vmatpush1.msra.mxu0 0.0
    %114 = vmatprep.subr.mxu0 0.0
    %115 = vmatpush1.msra.mxu0 0.0
    %116 = vmatprep.subr.mxu0 0.0
    %117 = vmatpush1.msra.mxu0 0.0
    %118 = vmatprep.subr.mxu0 0.0
    %119 = vmatpush1.msra.mxu0 0.0
    %120 = vmatprep.subr.mxu0 0.0
    %121 = vmatpush1.msra.mxu0 0.0
    %122 = vmatprep.subr.mxu0 0.0
    %123 = vmatpush1.msra.mxu0 0.0
    %124 = vmatprep.subr.mxu0 0.0
    %125 = vmatpush1.msra.mxu0 %v39
    %126 = vmatprep.subr.mxu0 0.0
    %127 = vmatpush1.msra.mxu0 %v38
    %128 = vmatprep.subr.mxu0 0.0
    %129 = vmatpush2.msra.mxu0 0.0
    %130 = vmatprep.subr.mxu0 0.0
    %131 = vmatpush2.msra.mxu0 0.0
    %132 = vmatprep.subr.mxu0 0.0
    %133 = vmatpush2.msra.mxu0 0.0
    %134 = vmatprep.subr.mxu0 0.0
    %135 = vmatpush2.msra.mxu0 0.0
    %136 = vmatprep.subr.mxu0 0.0
    %137 = vmatpush2.msra.mxu0 0.0
    %138 = vmatprep.subr.mxu0 0.0
    %139 = vmatpush2.msra.mxu0 0.0
    %140 = vmatprep.subr.mxu0 0.0
    %141 = vmatpush2.msra.mxu0 0.0
    %142 = vmatprep.subr.mxu0 0.0
    %143 = vmatpush2.msra.mxu0 0.0
    %144 = vmatprep.subr.mxu0 0.0
    %145 = vmatpush2.msra.mxu0 0.0
    %146 = vmatprep.subr.mxu0 0.0
    %147 = vmatpush2.msra.mxu0 0.0
    %148 = vmatprep.subr.mxu0 0.0
    %149 = vmatpush2.msra.mxu0 0.0
    %150 = vmatprep.subr.mxu0 0.0
    %151 = vmatpush2.msra.mxu0 0.0
    %152 = vmatprep.subr.mxu0 0.0
    %153 = vmatpush2.msra.mxu0 0.0
    %154 = vmatprep.subr.mxu0 0.0
    %155 = vmatpush2.msra.mxu0 0.0
    %156 = vmatprep.subr.mxu0 0.0
    %157 = vmatpush2.msra.mxu0 0.0
    %158 = vmatprep.subr.mxu0 0.0
    %159 = vmatpush2.msra.mxu0 0.0
    %160 = vmatprep.mubr.f32.mxu0 0.0
    %161 = vmatmul.mubr.f32.gmra.mxu0 %v49
    %v162 = vpop.f32.mrf.mxu0
    %v163 = vadd.f32 %v45, %v162
    %v164 = vpop.f32.mrf.mxu0
    %165 = vmatprep.mubr.f32.mxu0 0.0
    %166 = vmatmul.mubr.f32.gmra.mxu0 %v52
    %v167 = vpop.f32.mrf.mxu0
    %v168 = vadd.f32 %v45, %v167
    %v169 = vpop.f32.mrf.mxu0
    %170 = vmatprep.mubr.f32.mxu0 0.0
    %171 = vmatmul.mubr.f32.gmra.mxu0 %v55
    %v172 = vpop.f32.mrf.mxu0
    %v173 = vadd.f32 %v45, %v172
    %v174 = vpop.f32.mrf.mxu0
    %175 = vmatprep.mubr.f32.mxu0 0.0
    %176 = vmatmul.mubr.f32.gmra.mxu0 %v58
    %v177 = vpop.f32.mrf.mxu0
    %v178 = vadd.f32 %v45, %v177
    %v179 = vpop.f32.mrf.mxu0
    %180 = vmatprep.mubr.f32.mxu0 0.0
    %181 = vmatmul.mubr.f32.gmra.mxu0 %v61
    %v182 = vpop.f32.mrf.mxu0
    %v183 = vadd.f32 %v45, %v182
    %v184 = vpop.f32.mrf.mxu0
    %185 = vmatprep.mubr.f32.mxu0 0.0
    %186 = vmatmul.mubr.f32.gmra.mxu0 %v64
    %v187 = vpop.f32.mrf.mxu0
    %v188 = vadd.f32 %v45, %v187
    %v189 = vpop.f32.mrf.mxu0
    %190 = vmatprep.mubr.f32.mxu0 0.0
    %191 = vmatmul.mubr.f32.gmra.mxu0 %v67
    %v192 = vpop.f32.mrf.mxu0
    %v193 = vadd.f32 %v45, %v192
    %v194 = vpop.f32.mrf.mxu0
    %195 = vmatprep.mubr.f32.mxu0 0.0
    %196 = vmatmul.mubr.f32.gmra.mxu0 %v70
    %v197 = vpop.f32.mrf.mxu0
    %v198 = vadd.f32 %v45, %v197
    %v199 = vpop.f32.mrf.mxu0
    %200 = vmatprep.mubr.f32.mxu0 0.0
    %201 = vmatmul.mubr.f32.gmra.mxu0 %v73
    %v202 = vpop.f32.mrf.mxu0
    %v203 = vadd.f32 %v45, %v202
    %v204 = vpop.f32.mrf.mxu0
    %205 = vmatprep.mubr.f32.mxu0 0.0
    %206 = vmatmul.mubr.f32.gmra.mxu0 %v76
    %v207 = vpop.f32.mrf.mxu0
    %v208 = vadd.f32 %v45, %v207
    %v209 = vpop.f32.mrf.mxu0
    %210 = vmatprep.mubr.f32.mxu0 0.0
    %211 = vmatmul.mubr.f32.gmra.mxu0 %v79
    %v212 = vpop.f32.mrf.mxu0
    %v213 = vadd.f32 %v45, %v212
    %v214 = vpop.f32.mrf.mxu0
    %215 = vmatprep.mubr.f32.mxu0 0.0
    %216 = vmatmul.mubr.f32.gmra.mxu0 %v82
    %v217 = vpop.f32.mrf.mxu0
    %v218 = vadd.f32 %v45, %v217
    %v219 = vpop.f32.mrf.mxu0
    %220 = vmatprep.mubr.f32.mxu0 0.0
    %221 = vmatmul.mubr.f32.gmra.mxu0 %v85
    %v222 = vpop.f32.mrf.mxu0
    %v223 = vadd.f32 %v45, %v222
    %v224 = vpop.f32.mrf.mxu0
    %225 = vmatprep.mubr.f32.mxu0 0.0
    %226 = vmatmul.mubr.f32.gmra.mxu0 %v88
    %v227 = vpop.f32.mrf.mxu0
    %v228 = vadd.f32 %v45, %v227
    %v229 = vpop.f32.mrf.mxu0
    %230 = vmatprep.mubr.f32.mxu0 0.0
    %231 = vmatmul.mubr.f32.gmra.mxu0 %v91
    %v232 = vpop.f32.mrf.mxu0
    %v233 = vadd.f32 %v45, %v232
    %v234 = vpop.f32.mrf.mxu0
    %235 = vmatprep.mubr.f32.mxu0 0.0
    %236 = vmatmul.mubr.f32.gmra.mxu0 %v94
    %v237 = vpop.f32.mrf.mxu0
    %v238 = vadd.f32 %v45, %v237
    %v239 = vpop.f32.mrf.mxu0
    %240 = vdwg.mxu0
    %v241 = vxor.u32 %v163, 2147483648
    %v242 = vxor.u32 %v168, 2147483648
    %v243 = vxor.u32 %v173, 2147483648
    %v244 = vxor.u32 %v178, 2147483648
    %v245 = vxor.u32 %v183, 2147483648
    %v246 = vxor.u32 %v188, 2147483648
    %v247 = vxor.u32 %v193, 2147483648
    %v248 = vxor.u32 %v198, 2147483648
    %v249 = vxor.u32 %v203, 2147483648
    %v250 = vxor.u32 %v208, 2147483648
    %v251 = vxor.u32 %v213, 2147483648
    %v252 = vxor.u32 %v218, 2147483648
    %v253 = vxor.u32 %v223, 2147483648
    %v254 = vxor.u32 %v228, 2147483648
    %v255 = vxor.u32 %v233, 2147483648
    %v256 = vxor.u32 %v238, 2147483648
    %v257 = vmul.f32 %v241, 1.442695
    %v258 = vpow.pop %v257
    %v259 = vmul.f32 %v242, 1.442695
    %v260 = vpow.pop %v259
    %v261 = vmul.f32 %v243, 1.442695
    %v262 = vpow.pop %v261
    %v263 = vmul.f32 %v244, 1.442695
    %v264 = vpow.pop %v263
    %v265 = vmul.f32 %v245, 1.442695
    %v266 = vpow.pop %v265
    %v267 = vmul.f32 %v246, 1.442695
    %v268 = vpow.pop %v267
    %v269 = vmul.f32 %v247, 1.442695
    %v270 = vpow.pop %v269
    %v271 = vmul.f32 %v248, 1.442695
    %v272 = vpow.pop %v271
    %v273 = vmul.f32 %v249, 1.442695
    %v274 = vpow.pop %v273
    %v275 = vmul.f32 %v250, 1.442695
    %v276 = vpow.pop %v275
    %v277 = vmul.f32 %v251, 1.442695
    %v278 = vpow.pop %v277
    %v279 = vmul.f32 %v252, 1.442695
    %v280 = vpow.pop %v279
    %v281 = vmul.f32 %v253, 1.442695
    %v282 = vpow.pop %v281
    %v283 = vmul.f32 %v254, 1.442695
    %v284 = vpow.pop %v283
    %v285 = vmul.f32 %v255, 1.442695
    %v286 = vpow.pop %v285
    %v287 = vmul.f32 %v256, 1.442695
    %v288 = vpow.pop %v287
    %v289 = vadd.f32 %v258, 1.0
    %v290 = vadd.f32 %v260, 1.0
    %v291 = vadd.f32 %v262, 1.0
    %v292 = vadd.f32 %v264, 1.0
    %v293 = vadd.f32 %v266, 1.0
    %v294 = vadd.f32 %v268, 1.0
    %v295 = vadd.f32 %v270, 1.0
    %v296 = vadd.f32 %v272, 1.0
    %v297 = vadd.f32 %v274, 1.0
    %v298 = vadd.f32 %v276, 1.0
    %v299 = vadd.f32 %v278, 1.0
    %v300 = vadd.f32 %v280, 1.0
    %v301 = vadd.f32 %v282, 1.0
    %v302 = vadd.f32 %v284, 1.0
    %v303 = vadd.f32 %v286, 1.0
    %v304 = vadd.f32 %v288, 1.0
    %v305 = vrcp.pop %v289
    %v306 = vmul.f32 1.0, %v305
    %v307 = vrcp.pop %v290
    %v308 = vmul.f32 1.0, %v307
    %v309 = vrcp.pop %v291
    %v310 = vmul.f32 1.0, %v309
    %v311 = vrcp.pop %v292
    %v312 = vmul.f32 1.0, %v311
    %v313 = vrcp.pop %v293
    %v314 = vmul.f32 1.0, %v313
    %v315 = vrcp.pop %v294
    %v316 = vmul.f32 1.0, %v315
    %v317 = vrcp.pop %v295
    %v318 = vmul.f32 1.0, %v317
    %v319 = vrcp.pop %v296
    %v320 = vmul.f32 1.0, %v319
    %v321 = vrcp.pop %v297
    %v322 = vmul.f32 1.0, %v321
    %v323 = vrcp.pop %v298
    %v324 = vmul.f32 1.0, %v323
    %v325 = vrcp.pop %v299
    %v326 = vmul.f32 1.0, %v325
    %v327 = vrcp.pop %v300
    %v328 = vmul.f32 1.0, %v327
    %v329 = vrcp.pop %v301
    %v330 = vmul.f32 1.0, %v329
    %v331 = vrcp.pop %v302
    %v332 = vmul.f32 1.0, %v331
    %v333 = vrcp.pop %v303
    %v334 = vmul.f32 1.0, %v333
    %v335 = vrcp.pop %v304
    %v336 = vmul.f32 1.0, %v335
    %v337 = vld [vmem:[%s3] sm:$0x1]
    %s338 = sld [smem:[#allocation2]]
    %v339 = vstv %s338
    %vm340 = vcmask 261120
    %v342 = vsel %vm340, %v337, 0
    %v345 = vsel %vm340, %v306, 0
    %v348 = vsel %vm340, %v308, 0
    %v351 = vsel %vm340, %v310, 0
    %v354 = vsel %vm340, %v312, 0
    %v357 = vsel %vm340, %v314, 0
    %v360 = vsel %vm340, %v316, 0
    %v363 = vsel %vm340, %v318, 0
    %v366 = vsel %vm340, %v320, 0
    %v369 = vsel %vm340, %v322, 0
    %v372 = vsel %vm340, %v324, 0
    %v375 = vsel %vm340, %v326, 0
    %v378 = vsel %vm340, %v328, 0
    %v381 = vsel %vm340, %v330, 0
    %v384 = vsel %vm340, %v332, 0
    %v387 = vsel %vm340, %v334, 0
    %v390 = vsel %vm340, %v336, 0
    %392 = vmatprep.subr.mxu0 0.0
    %393 = vmatpush1.xpose.msra.mxu0 %v390
    %394 = vmatprep.subr.mxu0 0.0
    %395 = vmatpush1.xpose.msra.mxu0 %v387
    %396 = vmatprep.subr.mxu0 0.0
    %397 = vmatpush1.xpose.msra.mxu0 %v384
    %398 = vmatprep.subr.mxu0 0.0
    %399 = vmatpush1.xpose.msra.mxu0 %v381
    %400 = vmatprep.subr.mxu0 0.0
    %401 = vmatpush1.xpose.msra.mxu0 %v378
    %402 = vmatprep.subr.mxu0 0.0
    %403 = vmatpush1.xpose.msra.mxu0 %v375
    %404 = vmatprep.subr.mxu0 0.0
    %405 = vmatpush1.xpose.msra.mxu0 %v372
    %406 = vmatprep.subr.mxu0 0.0
    %407 = vmatpush1.xpose.msra.mxu0 %v369
    %408 = vmatprep.subr.mxu0 0.0
    %409 = vmatpush1.xpose.msra.mxu0 %v366
    %410 = vmatprep.subr.mxu0 0.0
    %411 = vmatpush1.xpose.msra.mxu0 %v363
    %412 = vmatprep.subr.mxu0 0.0
    %413 = vmatpush1.xpose.msra.mxu0 %v360
    %414 = vmatprep.subr.mxu0 0.0
    %415 = vmatpush1.xpose.msra.mxu0 %v357
    %416 = vmatprep.subr.mxu0 0.0
    %417 = vmatpush1.xpose.msra.mxu0 %v354
    %418 = vmatprep.subr.mxu0 0.0
    %419 = vmatpush1.xpose.msra.mxu0 %v351
    %420 = vmatprep.subr.mxu0 0.0
    %421 = vmatpush1.xpose.msra.mxu0 %v348
    %422 = vmatprep.subr.mxu0 0.0
    %423 = vmatpush1.xpose.msra.mxu0 %v345
    %424 = vmatprep.subr.mxu0 0.0
    %425 = vmatpush2.xpose.msra.mxu0 0.0
    %426 = vmatprep.subr.mxu0 0.0
    %427 = vmatpush2.xpose.msra.mxu0 0.0
    %428 = vmatprep.subr.mxu0 0.0
    %429 = vmatpush2.xpose.msra.mxu0 0.0
    %430 = vmatprep.subr.mxu0 0.0
    %431 = vmatpush2.xpose.msra.mxu0 0.0
    %432 = vmatprep.subr.mxu0 0.0
    %433 = vmatpush2.xpose.msra.mxu0 0.0
    %434 = vmatprep.subr.mxu0 0.0
    %435 = vmatpush2.xpose.msra.mxu0 0.0
    %436 = vmatprep.subr.mxu0 0.0
    %437 = vmatpush2.xpose.msra.mxu0 0.0
    %438 = vmatprep.subr.mxu0 0.0
    %439 = vmatpush2.xpose.msra.mxu0 0.0
    %440 = vmatprep.subr.mxu0 0.0
    %441 = vmatpush2.xpose.msra.mxu0 0.0
    %442 = vmatprep.subr.mxu0 0.0
    %443 = vmatpush2.xpose.msra.mxu0 0.0
    %444 = vmatprep.subr.mxu0 0.0
    %445 = vmatpush2.xpose.msra.mxu0 0.0
    %446 = vmatprep.subr.mxu0 0.0
    %447 = vmatpush2.xpose.msra.mxu0 0.0
    %448 = vmatprep.subr.mxu0 0.0
    %449 = vmatpush2.xpose.msra.mxu0 0.0
    %450 = vmatprep.subr.mxu0 0.0
    %451 = vmatpush2.xpose.msra.mxu0 0.0
    %452 = vmatprep.subr.mxu0 0.0
    %453 = vmatpush2.xpose.msra.mxu0 0.0
    %454 = vmatprep.subr.mxu0 0.0
    %455 = vmatpush2.xpose.msra.mxu0 0.0
    %456 = vmatprep.mubr.f32.mxu0 0.0
    %457 = vmatmul.mubr.f32.gmra.mxu0 %v342
    %v458 = vpop.f32.mrf.mxu0
    %v459 = vadd.f32 %v339, %v458
    %v460 = vpop.f32.mrf.mxu0
    %461 = vdwg.mxu0
    %462 = vst [vmem:[#allocation3] sm:$0x1] %v459
    // Predicated region
    $region22: #{tpu_custom_call.1} parent=1 // pred_check
      _
    $region23: #{tpu_custom_call.1} parent=1 // pred_check_branch
      %464 = sbr.rel (0) target = $region25
    $region24: #{tpu_custom_call.1} parent=1 // pred_region
      %s466 = ssub.s32 16, 16
      %467 = vsyncadd [#allocation4], %s466
      %s469 = sshll.u32 [#allocation3], 4
      %s470 = int_to_ptr.vmem [resolvable:$true] %s469
      %472 = dma.vmem_to_hbm [thread:$0]  %s470, 16, %s5, [#allocation4]
    $region25: #{tpu_custom_call.1} parent=1 // pred_fallthru
      _
    // Predicated region
    $region26: #{tpu_custom_call.1} parent=1 // pred_check
      _
    $region27: #{tpu_custom_call.1} parent=1 // pred_check_branch
      %474 = sbr.rel (0) target = $region29
    $region28: #{tpu_custom_call.1} parent=1 // pred_region
      %475 = dma.done [#allocation4], 16
    $region29: #{tpu_custom_call.1} parent=1 // pred_fallthru
      _
    %476 = vsyncpa [#allocation4], 1

</llo_original>
